<compile_context>
chip_gen: v6e
topology: v6e:2x2x1
jax: 0.10.0
libtpu: 0.0.40
codegen_flags: <defaults>
</compile_context>

<pallas_src>
import functools

import jax
import jax.numpy as jnp
from jax.experimental import pallas as pl
from jax.experimental.pallas import tpu as pltpu


# --------------------------- generation-aware budgets --------------------------- #

@functools.lru_cache(maxsize=1)
def _chip_budgets():
    """Returns (vmem_limit_bytes, block_budget_bytes, num_cores).

    128 MiB-VMEM chips (v5e/v6e, single TensorCore): large blocks, high scoped limit.
    64 MiB-VMEM chips (v7x, 2 TensorCores): block budget sized for 2 tensors x 2 buffers
    (= 4 x block) + weights + compiler headroom under a <= 48 MiB limit.
    Falls back to v7x-safe values if the query is unavailable.
    """
    vmem_cap = None
    num_cores = None
    try:
        info = pltpu.get_tpu_info()
        cap = int(getattr(info, "vmem_capacity_bytes", 0) or 0)
        vmem_cap = cap if cap > 0 else None
        for attr in ("num_cores", "num_tensorcores", "tensorcores_per_chip",
                     "cores_per_chip"):
            v = getattr(info, attr, None)
            if v:
                num_cores = int(v)
                break
    except Exception:
        pass
    if vmem_cap is None:
        vmem_cap = 64 * 1024 * 1024
    if num_cores is None:
        # Heuristic: 64 MiB per-core VMEM parts (v7x) have 2 TensorCores.
        num_cores = 2 if vmem_cap <= 64 * 1024 * 1024 else 1
    if vmem_cap >= 128 * 1024 * 1024:        # v5e / v6e
        return 96 * 1024 * 1024, 20 * 1024 * 1024, num_cores
    return 48 * 1024 * 1024, 9 * 1024 * 1024, num_cores


# --------------------------------- kernels -------------------------------------- #

def _se_fused_kernel(x_ref, w1_ref, w2_ref, o_ref, *, spatial_axis, inv_hw):
    # Single pass: pool + excite + scale on a (bt, C, HW) or (bt, HW, C) block.
    # NOTE: padded (out-of-bounds) batch rows in the last block hold garbage; every op
    # here is strictly per-batch-row (sum over spatial, row-wise matmuls, row-wise
    # sigmoid/scale), so garbage rows never contaminate valid rows and their output
    # rows are dropped on writeback.  Keep it that way.
    x = x_ref[...]
    s = jnp.sum(x, axis=spatial_axis, dtype=jnp.float32) * inv_hw            # (bt, C)
    y1 = jnp.maximum(jnp.dot(s, w1_ref[...],
                             preferred_element_type=jnp.float32), 0.0)        # (bt, Cr)
    g = jax.nn.sigmoid(jnp.dot(y1, w2_ref[...],
                               preferred_element_type=jnp.float32))           # (bt, C)
    # Gate is cast to x.dtype before the multiply (matches the module: both operands of
    # `module_input * x` carry the model dtype).  Slightly less precise than an f32
    # multiply for bf16 inputs, but intentional and reference-matching.
    gb = jnp.expand_dims(g, spatial_axis).astype(x.dtype)
    o_ref[...] = (x * gb).astype(o_ref.dtype)


def _se_pool_gate_kernel(x_ref, w1_ref, w2_ref, g_ref, acc_ref, *,
                         spatial_axis, thw, tail_len, inv_hw, mask_tail):
    # Two-pass, pass 1: spatially-tiled f32-accumulated mean + excite -> gates (bt, C).
    # Correctness requires the spatial (reduction) axis to stay the innermost grid axis,
    # marked "arbitrary", with the zero-init at si == 0; do not reorder or parallelize it
    # without privatizing the accumulator.
    si = pl.program_id(1)
    ns = pl.num_programs(1)

    @pl.when(si == 0)
    def _init():
        acc_ref[...] = jnp.zeros_like(acc_ref)

    def _accumulate(masked):
        x = x_ref[...]
        if masked:
            shp = [1, 1, 1]
            shp[spatial_axis] = thw
            pos = jax.lax.broadcasted_iota(jnp.int32, tuple(shp), spatial_axis)
            x = jnp.where(pos < tail_len, x, jnp.zeros_like(x))
        acc_ref[...] += jnp.sum(x, axis=spatial_axis, dtype=jnp.float32)

    if mask_tail:
        # Tail mask only runs on the last spatial tile.
        @pl.when(si < ns - 1)
        def _body():
            _accumulate(False)

        @pl.when(si == ns - 1)
        def _tail():
            _accumulate(True)
    else:
        _accumulate(False)

    @pl.when(si == ns - 1)
    def _finalize():
        s = acc_ref[...] * inv_hw
        y1 = jnp.maximum(jnp.dot(s, w1_ref[...],
                                 preferred_element_type=jnp.float32), 0.0)
        g_ref[...] = jax.nn.sigmoid(jnp.dot(y1, w2_ref[...],
                                            preferred_element_type=jnp.float32))


def _se_partial_pool_kernel(x_ref, p_ref, *, spatial_axis, thw, tail_len, mask_tail):
    # Split-plan pass 1: each spatial tile writes its own f32 partial sum (1, B, C).
    # The spatial grid axis is fully parallel (no accumulator), so it shards across
    # TensorCores even when B == 1.
    si = pl.program_id(0)
    ns = pl.num_programs(0)

    def _reduce(masked):
        x = x_ref[...]
        if masked:
            shp = [1, 1, 1]
            shp[spatial_axis] = thw
            pos = jax.lax.broadcasted_iota(jnp.int32, tuple(shp), spatial_axis)
            x = jnp.where(pos < tail_len, x, jnp.zeros_like(x))
        p_ref[...] = jnp.sum(x, axis=spatial_axis, dtype=jnp.float32)[None]

    if mask_tail:
        @pl.when(si < ns - 1)
        def _body():
            _reduce(False)

        @pl.when(si == ns - 1)
        def _tail():
            _reduce(True)
    else:
        _reduce(False)


def _se_scale_kernel(x_ref, g_ref, o_ref, *, spatial_axis):
    # Elementwise per-channel gate; fully parallel over (batch block, spatial tile).
    x = x_ref[...]
    gb = jnp.expand_dims(g_ref[...], spatial_axis).astype(x.dtype)
    o_ref[...] = (x * gb).astype(o_ref.dtype)


# --------------------------------- wrappers ------------------------------------- #

def _se_single_pass(x_flat, w1, w2, channels_last, budgets, alias_input):
    vmem_limit, block_budget, num_cores = budgets
    B = x_flat.shape[0]
    if channels_last:
        _, HW, C = x_flat.shape
        spatial_axis = 1
    else:
        _, C, HW = x_flat.shape
        spatial_axis = 2
    Cr = w1.shape[1]
    itemsize = x_flat.dtype.itemsize

    per_b = C * HW * itemsize
    bt = max(1, min(B, block_budget // max(1, per_b)))
    nb = pl.cdiv(B, bt)
    # Only split the batch block on multi-TensorCore chips (v7x megacore); on single-TC
    # chips (v5e/v6e) splitting just shrinks the block and adds a grid step.
    if num_cores > 1 and B >= num_cores and nb < num_cores:
        bt = pl.cdiv(B, num_cores)
        nb = pl.cdiv(B, bt)

    blk = (bt, HW, C) if channels_last else (bt, C, HW)
    kernel = functools.partial(_se_fused_kernel, spatial_axis=spatial_axis,
                               inv_hw=1.0 / HW)
    cost = pl.CostEstimate(
        flops=int(4 * B * C * Cr + 3 * B * C * HW),
        transcendentals=int(B * C),
        bytes_accessed=int(2 * B * C * HW * itemsize + 8 * C * Cr),
    )
    # TODO(synk): sweep pipeline_mode=pl.Buffered(3) on the x BlockSpec if profiling ever
    # shows exposed DMA with many small blocks.
    return pl.pallas_call(
        kernel,
        out_shape=jax.ShapeDtypeStruct(x_flat.shape, x_flat.dtype),
        grid_spec=pltpu.PrefetchScalarGridSpec(
            num_scalar_prefetch=0,
            grid=(nb,),
            in_specs=[
                pl.BlockSpec(blk, lambda b: (b, 0, 0)),
                pl.BlockSpec((C, Cr), lambda b: (0, 0)),
                pl.BlockSpec((Cr, C), lambda b: (0, 0)),
            ],
            out_specs=pl.BlockSpec(blk, lambda b: (b, 0, 0)),
        ),
        compiler_params=pltpu.CompilerParams(
            dimension_semantics=("parallel",),
            vmem_limit_bytes=vmem_limit),
        cost_estimate=cost,
        input_output_aliases=({0: 0} if alias_input else {}),
    )(x_flat, w1, w2)


def _se_scale_call(x_flat, gates, channels_last, budgets, bt, thw, alias_input):
    vmem_limit, _, _ = budgets
    B = x_flat.shape[0]
    if channels_last:
        _, HW, C = x_flat.shape
        spatial_axis = 1
        x_blk = (bt, thw, C)
        x_map = lambda bi, si: (bi, si, 0)
    else:
        _, C, HW = x_flat.shape
        spatial_axis = 2
        x_blk = (bt, C, thw)
        x_map = lambda bi, si: (bi, 0, si)
    itemsize = x_flat.dtype.itemsize
    nb = pl.cdiv(B, bt)
    ns = pl.cdiv(HW, thw)

    return pl.pallas_call(
        functools.partial(_se_scale_kernel, spatial_axis=spatial_axis),
        out_shape=jax.ShapeDtypeStruct(x_flat.shape, x_flat.dtype),
        grid_spec=pltpu.PrefetchScalarGridSpec(
            num_scalar_prefetch=0,
            grid=(nb, ns),
            in_specs=[
                pl.BlockSpec(x_blk, x_map),
                pl.BlockSpec((bt, gates.shape[1]), lambda bi, si: (bi, 0)),
            ],
            out_specs=pl.BlockSpec(x_blk, x_map),
        ),
        compiler_params=pltpu.CompilerParams(
            dimension_semantics=("parallel", "parallel"),
            vmem_limit_bytes=vmem_limit),
        cost_estimate=pl.CostEstimate(
            flops=int(B * C * HW), transcendentals=0,
            bytes_accessed=int(2 * B * C * HW * itemsize)),
        input_output_aliases=({0: 0} if alias_input else {}),
    )(x_flat, gates)


def _se_two_pass(x_flat, w1, w2, channels_last, budgets, max_spatial_tile, alias_input):
    vmem_limit, block_budget, num_cores = budgets
    B = x_flat.shape[0]
    if channels_last:
        _, HW, C = x_flat.shape
        spatial_axis, align = 1, 8
    else:
        _, C, HW = x_flat.shape
        spatial_axis, align = 2, 128
    Cr = w1.shape[1]
    itemsize = x_flat.dtype.itemsize

    # Batch block: keep the (bt, C) gate block layout-legal (bt == B or bt % 8 == 0)
    # while respecting the generation-aware budget together with a minimal spatial tile.
    if B <= 8:
        bt = B
    else:
        bt_cap = max(1, block_budget // max(1, C * align * itemsize))
        bt = min(B, max(8, (bt_cap // 8) * 8))
    nb = pl.cdiv(B, bt)

    thw = block_budget // max(1, bt * C * itemsize)
    if max_spatial_tile is not None:
        thw = min(thw, max_spatial_tile)
    if thw >= HW:
        thw = HW
    else:
        thw = max(align, (thw // align) * align)
    ns = pl.cdiv(HW, thw)
    mask_tail = (HW % thw) != 0
    tail_len = HW - (ns - 1) * thw

    if channels_last:
        x_blk = (bt, thw, C)
        x_map = lambda bi, si: (bi, si, 0)
    else:
        x_blk = (bt, C, thw)
        x_map = lambda bi, si: (bi, 0, si)

    pool_kernel = functools.partial(
        _se_pool_gate_kernel, spatial_axis=spatial_axis,
        thw=thw, tail_len=tail_len, inv_hw=1.0 / HW, mask_tail=mask_tail)

    gates = pl.pallas_call(
        pool_kernel,
        out_shape=jax.ShapeDtypeStruct((B, C), jnp.float32),
        grid_spec=pltpu.PrefetchScalarGridSpec(
            num_scalar_prefetch=0,
            grid=(nb, ns),     # spatial reduction axis innermost + "arbitrary"
            in_specs=[
                pl.BlockSpec(x_blk, x_map),
                pl.BlockSpec((C, Cr), lambda bi, si: (0, 0)),
                pl.BlockSpec((Cr, C), lambda bi, si: (0, 0)),
            ],
            out_specs=pl.BlockSpec((bt, C), lambda bi, si: (bi, 0)),
            scratch_shapes=[pltpu.VMEM((bt, C), jnp.float32)],
        ),
        compiler_params=pltpu.CompilerParams(
            dimension_semantics=("parallel", "arbitrary"),
            vmem_limit_bytes=vmem_limit),
        cost_estimate=pl.CostEstimate(
            flops=int(B * C * HW + 4 * B * C * Cr),
            transcendentals=int(B * C),
            bytes_accessed=int(B * C * HW * itemsize)),
    )(x_flat, w1, w2)

    return _se_scale_call(x_flat, gates, channels_last, budgets, bt, thw, alias_input)


def _se_split_plan(x_flat, w1, w2, channels_last, budgets, max_spatial_tile, alias_input):
    """3-stage plan for tiny batches (B < num_cores) on multi-TensorCore chips:
    parallel spatial partial-sum pooling -> tiny excite in plain XLA -> parallel scale.
    Guarantees >= 2 parallel grid blocks in every memory-heavy kernel even at B == 1."""
    vmem_limit, block_budget, num_cores = budgets
    B = x_flat.shape[0]
    if channels_last:
        _, HW, C = x_flat.shape
        spatial_axis, align = 1, 8
    else:
        _, C, HW = x_flat.shape
        spatial_axis, align = 2, 128
    itemsize = x_flat.dtype.itemsize

    # Spatial tile: roughly even split across cores, aligned, within the VMEM budget,
    # and strictly < HW so there are at least 2 tiles.
    target = pl.cdiv(HW, max(2, num_cores))
    thw = align * pl.cdiv(target, align)
    cap = block_budget // max(1, B * C * itemsize)
    cap = max(align, (cap // align) * align)
    thw = min(thw, cap)
    if max_spatial_tile is not None:
        thw = min(thw, max(align, (max_spatial_tile // align) * align))
    thw = min(thw, max(align, ((HW - 1) // align) * align))
    ns = pl.cdiv(HW, thw)
    mask_tail = (HW % thw) != 0
    tail_len = HW - (ns - 1) * thw

    if channels_last:
        x_blk = (B, thw, C)
        x_map = lambda si: (0, si, 0)
    else:
        x_blk = (B, C, thw)
        x_map = lambda si: (0, 0, si)

    partials = pl.pallas_call(
        functools.partial(_se_partial_pool_kernel, spatial_axis=spatial_axis,
                          thw=thw, tail_len=tail_len, mask_tail=mask_tail),
        out_shape=jax.ShapeDtypeStruct((ns, B, C), jnp.float32),
        grid_spec=pltpu.PrefetchScalarGridSpec(
            num_scalar_prefetch=0,
            grid=(ns,),
            in_specs=[pl.BlockSpec(x_blk, x_map)],
            out_specs=pl.BlockSpec((1, B, C), lambda si: (si, 0, 0)),
        ),
        compiler_params=pltpu.CompilerParams(
            dimension_semantics=("parallel",),
            vmem_limit_bytes=vmem_limit),
        cost_estimate=pl.CostEstimate(
            flops=int(B * C * HW), transcendentals=0,
            bytes_accessed=int(B * C * HW * itemsize + 4 * ns * B * C)),
    )(x_flat)

    # Tiny (B, C) excite in plain XLA: negligible work; keeps both Pallas kernels fully
    # parallel over >= num_cores blocks.
    s = jnp.sum(partials, axis=0) * (1.0 / HW)                              # (B, C) f32
    y1 = jnp.maximum(jnp.dot(s, w1, preferred_element_type=jnp.float32), 0.0)
    gates = jax.nn.sigmoid(jnp.dot(y1, w2, preferred_element_type=jnp.float32))

    return _se_scale_call(x_flat, gates, channels_last, budgets, B, thw, alias_input)


def se_module(x, w_fc1, w_fc2, *, data_format="NCHW", force_two_pass=False,
              force_split=False, max_spatial_tile=None, alias_input=False):
    """SEModule forward.

    x: (B, C, H, W) for data_format="NCHW" (PyTorch layout; free reshape, no transpose)
       or (B, H, W, C) for data_format="NHWC" (lane-dense channels, free reshape).
    w_fc1: (C//r, C)  weight of the 1x1 squeeze conv (fc1), no bias.
    w_fc2: (C, C//r)  weight of the 1x1 excite conv (fc2), no bias.
    alias_input: set True only if the caller donates x (aliases output onto x's buffer).
    """
    if data_format == "NCHW":
        B, C, H, W = x.shape
        channels_last = False
        x_flat = x.reshape(B, C, H * W)        # free reshape, lane axis = HW
    elif data_format == "NHWC":
        B, H, W, C = x.shape
        channels_last = True
        x_flat = x.reshape(B, H * W, C)        # free reshape, lane axis = C
    else:
        raise ValueError(f"unsupported data_format: {data_format}")
    HW = H * W
    itemsize = x.dtype.itemsize

    # Hoist weight transposes/casts out of the kernels (done once, tiny tensors).
    w1 = jnp.transpose(w_fc1).astype(jnp.float32)   # (C, Cr)
    w2 = jnp.transpose(w_fc2).astype(jnp.float32)   # (Cr, C)

    budgets = _chip_budgets()
    _, block_budget, num_cores = budgets
    per_b = C * HW * itemsize
    align = 8 if channels_last else 128

    can_split = HW > align
    use_split = can_split and (
        force_split or (num_cores > 1 and B < num_cores and per_b >= 64 * 1024))
    # Two-pass (3x HBM traffic) only when even a single-batch block cannot fit the
    # generation's per-block VMEM budget.
    use_two_pass = (not use_split) and (force_two_pass or per_b > block_budget)

    if use_split:
        out_flat = _se_split_plan(x_flat, w1, w2, channels_last, budgets,
                                  max_spatial_tile, alias_input)
    elif use_two_pass:
        out_flat = _se_two_pass(x_flat, w1, w2, channels_last, budgets,
                                max_spatial_tile, alias_input)
    else:
        out_flat = _se_single_pass(x_flat, w1, w2, channels_last, budgets, alias_input)

    if channels_last:
        return out_flat.reshape(B, H, W, C)
    return out_flat.reshape(B, C, H, W)


def se_reference(x, w_fc1, w_fc2):
    # Pure-JAX reference mirroring the PyTorch module (NCHW).
    s = jnp.mean(x.astype(jnp.float32), axis=(2, 3), keepdims=True)       # (B, C, 1, 1)
    y1 = jnp.maximum(jnp.einsum('rc,bcij->brij', w_fc1.astype(jnp.float32), s), 0.0)
    y2 = jnp.einsum('cr,brij->bcij', w_fc2.astype(jnp.float32), y1)
    g = jax.nn.sigmoid(y2)
    return (x * g.astype(x.dtype)).astype(x.dtype)


if __name__ == "__main__":
    key = jax.random.PRNGKey(0)

    def make_case(k, B, C, H, W, reduction, dtype=jnp.float32):
        kx, k1, k2 = jax.random.split(k, 3)
        Cr = max(1, C // reduction)
        x = jax.random.normal(kx, (B, C, H, W), dtype=dtype)
        w1 = (jax.random.normal(k1, (Cr, C), dtype=jnp.float32) / jnp.sqrt(C)).astype(dtype)
        w2 = (jax.random.normal(k2, (C, Cr), dtype=jnp.float32) / jnp.sqrt(Cr)).astype(dtype)
        return x, w1, w2

    ks = jax.random.split(key, 4)

    # Case 1: primary small shape, NCHW channels-first single-pass (no transposes).
    x, w1, w2 = make_case(ks[0], 2, 8, 16, 16, 2)
    out = se_module(x, w1, w2)
    jax.block_until_ready(out)
    ref = se_reference(x, w1, w2)
    assert out.shape == x.shape
    assert jnp.allclose(out, ref, atol=1e-5, rtol=1e-5), "case 1 mismatch vs reference"

    # Case 2: NHWC entry point (lane-dense channels, C = 128) — still no transposes
    # inside the op; caller already provides channels-last data.
    x, w1, w2 = make_case(ks[1], 2, 128, 7, 7, 4)
    x_nhwc = jnp.transpose(x, (0, 2, 3, 1))            # caller-side layout, not op cost
    out_nhwc = se_module(x_nhwc, w1, w2, data_format="NHWC")
    jax.block_until_ready(out_nhwc)
    ref = jnp.transpose(se_reference(x, w1, w2), (0, 2, 3, 1))
    assert jnp.allclose(out_nhwc, ref, atol=1e-5, rtol=1e-5), "case 2 mismatch vs reference"

    # Case 3: forced two-pass fallback with a ragged spatial tail (HW=169, tile=128).
    x, w1, w2 = make_case(ks[2], 2, 8, 13, 13, 2)
    out = se_module(x, w1, w2, force_two_pass=True, max_spatial_tile=128)
    jax.block_until_ready(out)
    ref = se_reference(x, w1, w2)
    assert jnp.allclose(out, ref, atol=1e-5, rtol=1e-5), "case 3 mismatch vs reference"

    # Case 4: forced split plan (B=1 path that keeps >=2 parallel blocks on v7x megacore).
    x, w1, w2 = make_case(ks[3], 1, 8, 16, 16, 2)
    out = se_module(x, w1, w2, force_split=True)
    jax.block_until_ready(out)
    ref = se_reference(x, w1, w2)
    assert jnp.allclose(out, ref, atol=1e-5, rtol=1e-5), "case 4 mismatch vs reference"

    print("KERNEL_OK")
</pallas_src>

<mosaic_0001>
module attributes {stable_mosaic.version = 11 : i64} {
  func.func @_se_fused_kernel(%arg0: i32, %arg1: memref<1x8x256xf32, #tpu.memory_space<vmem>>, %arg2: memref<8x4xf32, #tpu.memory_space<vmem>>, %arg3: memref<4x8xf32, #tpu.memory_space<vmem>>, %arg4: memref<1x8x256xf32, #tpu.memory_space<vmem>>) attributes {dimension_semantics = [#tpu.dimension_semantics<parallel>], iteration_bounds = array<i64: 2>, scalar_prefetch = 0 : i64, scratch_operands = 0 : i64, tpu.core_type = #tpu.core_type<tc>, window_params = [{transform_indices = @transform_0, window_bounds = array<i64: 1, 8, 256>}, {pipeline_mode = #tpu.pipeline_mode<synchronous>, transform_indices = @transform_1, window_bounds = array<i64: 8, 4>}, {pipeline_mode = #tpu.pipeline_mode<synchronous>, transform_indices = @transform_2, window_bounds = array<i64: 4, 8>}, {transform_indices = @transform_3, window_bounds = array<i64: 1, 8, 256>}]} {
    %c0 = arith.constant 0 : index
    %c0_0 = arith.constant 0 : index
    %c0_1 = arith.constant 0 : index
    %0 = vector.load %arg1[%c0, %c0_0, %c0_1] : memref<1x8x256xf32, #tpu.memory_space<vmem>>, vector<1x8x256xf32>
    %cst = arith.constant dense<0.000000e+00> : vector<1x8xf32>
    %1 = vector.multi_reduction <add>, %0, %cst [2] : vector<1x8x256xf32> to vector<1x8xf32>
    %cst_2 = arith.constant 3.906250e-03 : f32
    %2 = vector.broadcast %cst_2 : f32 to vector<1x8xf32>
    %3 = arith.mulf %1, %2 : vector<1x8xf32>
    %c0_3 = arith.constant 0 : index
    %c0_4 = arith.constant 0 : index
    %4 = vector.load %arg2[%c0_3, %c0_4] : memref<8x4xf32, #tpu.memory_space<vmem>>, vector<8x4xf32>
    %cst_5 = arith.constant dense<0.000000e+00> : vector<1x4xf32>
    %5 = tpu.matmul %3, %4, %cst_5 {dimension_numbers = #tpu.dot_dimension_numbers<[1], [0], [0], [1], [0, 0, 1, 1], [], []>} : vector<1x8xf32>, vector<8x4xf32>, vector<1x4xf32> -> vector<1x4xf32>
    %cst_6 = arith.constant 0.000000e+00 : f32
    %6 = vector.broadcast %cst_6 : f32 to vector<1x4xf32>
    %7 = arith.maximumf %5, %6 : vector<1x4xf32>
    %c0_7 = arith.constant 0 : index
    %c0_8 = arith.constant 0 : index
    %8 = vector.load %arg3[%c0_7, %c0_8] : memref<4x8xf32, #tpu.memory_space<vmem>>, vector<4x8xf32>
    %cst_9 = arith.constant dense<0.000000e+00> : vector<1x8xf32>
    %9 = tpu.matmul %7, %8, %cst_9 {dimension_numbers = #tpu.dot_dimension_numbers<[1], [0], [0], [1], [0, 0, 1, 1], [], []>} : vector<1x4xf32>, vector<4x8xf32>, vector<1x8xf32> -> vector<1x8xf32>
    %10 = arith.negf %9 : vector<1x8xf32>
    %11 = math.exp %10 : vector<1x8xf32>
    %cst_10 = arith.constant 1.000000e+00 : f32
    %12 = vector.broadcast %cst_10 : f32 to vector<1x8xf32>
    %13 = arith.addf %12, %11 : vector<1x8xf32>
    %14 = arith.divf %12, %13 : vector<1x8xf32>
    %15 = vector.shape_cast %14 : vector<1x8xf32> to vector<1x8x1xf32>
    %16 = vector.broadcast %15 : vector<1x8x1xf32> to vector<1x8x256xf32>
    %17 = arith.mulf %0, %16 : vector<1x8x256xf32>
    %c0_11 = arith.constant 0 : index
    %c0_12 = arith.constant 0 : index
    %c0_13 = arith.constant 0 : index
    %18 = vector.load %arg4[%c0_11, %c0_12, %c0_13] : memref<1x8x256xf32, #tpu.memory_space<vmem>>, vector<1x8x256xf32>
    tpu.vector_store %arg4[%c0_11, %c0_12, %c0_13], %17 {strides = array<i32>} : memref<1x8x256xf32, #tpu.memory_space<vmem>>, vector<1x8x256xf32>,
    return
  }
  func.func @transform_0(%arg0: i32) -> (i32, i32, i32) {
    %c0_i32 = arith.constant 0 : i32
    %c0_i32_0 = arith.constant 0 : i32
    %c0_i32_1 = arith.constant 0 : i32
    return %arg0, %c0_i32, %c0_i32_0 : i32, i32, i32
  }
  func.func @transform_1(%arg0: i32) -> (i32, i32) {
    %c0_i32 = arith.constant 0 : i32
    %c0_i32_0 = arith.constant 0 : i32
    %c0_i32_1 = arith.constant 0 : i32
    return %c0_i32, %c0_i32_0 : i32, i32
  }
  func.func @transform_2(%arg0: i32) -> (i32, i32) {
    %c0_i32 = arith.constant 0 : i32
    %c0_i32_0 = arith.constant 0 : i32
    %c0_i32_1 = arith.constant 0 : i32
    return %c0_i32, %c0_i32_0 : i32, i32
  }
  func.func @transform_3(%arg0: i32) -> (i32, i32, i32) {
    %c0_i32 = arith.constant 0 : i32
    %c0_i32_0 = arith.constant 0 : i32
    %c0_i32_1 = arith.constant 0 : i32
    return %arg0, %c0_i32, %c0_i32_0 : i32, i32, i32
  }
}

</mosaic_0001>

<llo_original>
// kernel: tpu_custom_call.1
$region0: #{tpu_custom_call.1}
  #allocation0 [shape = 'u32[]', space=smem, size = 0x4, offset = 0x4, fixed_abs, tag = 'smem constant byte address 0x4 - core index']
  #allocation1 [shape = 'u32[144,128]{1,0:T(1,128)}', space=vmem, size = 0x12000, scoped, tag = 'internal scratch']
  %s0 = inlined_call_operand.hbm [shape: f32[2,8,256], index: 0, kind: input, shape index: {}]
  %s1 = inlined_call_operand.vmem [shape: f32[8,4], index: 1, kind: input, shape index: {}]
  %s2 = inlined_call_operand.vmem [shape: f32[4,8], index: 2, kind: input, shape index: {}]
  %s3 = inlined_call_operand.hbm [shape: f32[2,8,256], index: 3, kind: output, shape index: {}]
  %s4 = sld [smem:[#allocation0]]
  $region49: #{tpu_custom_call.1} parent=0
    _
  %s6 = ssub.s32 1, %s4
  %s7 = scalar_select 0, %s6, %s4
  $region1: #{tpu_custom_call.1} parent=0
    #allocation2 [shape = 'u8[16384]{0}', space=vmem, size = 0x4000, scoped, tag = 'input window, operand 0']
    #allocation3 [shape = 's32[2]{0}', space=sflag, size = 0x8, scoped, tag = 'scoped memory for tpu_custom_call.1']
    #allocation4 [shape = 's32[2]{0}', space=sflag, size = 0x8, scoped, tag = 'scoped memory for tpu_custom_call.1']
    #allocation5 [shape = 'u8[16384]{0}', space=vmem, size = 0x4000, scoped, tag = 'output window, operand 0']
    %8 = vsyncpa [#allocation3], 0
    %s9 = scalar_lea.sflag [#allocation3], 1
    %10 = vsyncpa %s9, 0
    %11 = vsyncpa [#allocation4], 0
    %s12 = scalar_lea.sflag [#allocation4], 1
    %13 = vsyncpa %s12, 0
    loop: start=0, step=1, limit=4
    $region2: #{tpu_custom_call.1} parent=1 // loop_pre_header
      _
    $region3: #{tpu_custom_call.1} parent=1 // loop_header
      %s15 = sphi 0, %s19
      %p16 = scmp.ge.s32.totalorder %s15, 4
      %s25 = sphi 0, %s27
      %s28 = sphi 0, %s25
      %s29 = sphi 0, %s28
      %s45 = sphi 0, %s29
      %s49 = sphi 0, %s49
      %s51 = sphi 0, %s49
      %s52 = sphi 0, %s51
      %s66 = sphi 0, %s52
      %s70 = sphi 0, %s70
      %s72 = sphi 0, %s70
      %s73 = sphi 0, %s72
      %s87 = sphi 0, %s73
      %s93 = sphi 0, %s95
      %s96 = sphi 0, %s93
      %s97 = sphi 0, %s96
      %s113 = sphi 0, %s97
    $region4: #{tpu_custom_call.1} parent=1 // loop_header_branch
      %18 = sbr.rel (%p16) target = $region8
    $region5: #{tpu_custom_call.1} parent=1 // loop_body
      %s20 = ssub.s32 %s15, 1
      %s21 = ssub.s32 %s15, 2
      %s22 = sadd.s32 %s15, 1
      %s23 = ssub.s32 %s15, %s22
      %p24 = scmp.eq.s32.totalorder %s23, 0
      %s26 = sadd.s32 %s25, 1
      %s27 = scalar_select %p24, %s25, %s26
      %p30 = pneg %p24
      %p31 = scmp.eq.s32.totalorder %s15, 1
      %p32 = por %p30, %p31
      %p33 = scmp.ne.s32.totalorder %s25, %s28
      %p34 = scmp.eq.s32.totalorder %s15, 0
      %p35 = por %p33, %p34
      %p36 = scmp.ne.s32.totalorder %s25, %s28
      %p37 = scmp.eq.s32.totalorder %s20, 1
      %p38 = por %p36, %p37
      %p39 = scmp.ne.s32.totalorder %s28, %s29
      %p40 = scmp.eq.s32.totalorder %s20, 0
      %p41 = por %p39, %p40
      %p42 = scmp.ne.s32.totalorder %s28, %s29
      %p43 = scmp.eq.s32.totalorder %s21, 1
      %p44 = por %p42, %p43
      %p46 = scmp.ne.s32.totalorder %s29, %s45
      %p47 = scmp.eq.s32.totalorder %s21, 0
      %p48 = por %p46, %p47
      %s50 = sadd.s32 %s49, 1
      %p53 = scmp.eq.s32.totalorder %s15, 1
      %p54 = scmp.ne.s32.totalorder %s49, %s51
      %p55 = scmp.eq.s32.totalorder %s15, 0
      %p56 = por %p54, %p55
      %p57 = scmp.ne.s32.totalorder %s49, %s51
      %p58 = scmp.eq.s32.totalorder %s20, 1
      %p59 = por %p57, %p58
      %p60 = scmp.ne.s32.totalorder %s51, %s52
      %p61 = scmp.eq.s32.totalorder %s20, 0
      %p62 = por %p60, %p61
      %p63 = scmp.ne.s32.totalorder %s51, %s52
      %p64 = scmp.eq.s32.totalorder %s21, 1
      %p65 = por %p63, %p64
      %p67 = scmp.ne.s32.totalorder %s52, %s66
      %p68 = scmp.eq.s32.totalorder %s21, 0
      %p69 = por %p67, %p68
      %s71 = sadd.s32 %s70, 1
      %p74 = scmp.eq.s32.totalorder %s15, 1
      %p75 = scmp.ne.s32.totalorder %s70, %s72
      %p76 = scmp.eq.s32.totalorder %s15, 0
      %p77 = por %p75, %p76
      %p78 = scmp.ne.s32.totalorder %s70, %s72
      %p79 = scmp.eq.s32.totalorder %s20, 1
      %p80 = por %p78, %p79
      %p81 = scmp.ne.s32.totalorder %s72, %s73
      %p82 = scmp.eq.s32.totalorder %s20, 0
      %p83 = por %p81, %p82
      %p84 = scmp.ne.s32.totalorder %s72, %s73
      %p85 = scmp.eq.s32.totalorder %s21, 1
      %p86 = por %p84, %p85
      %p88 = scmp.ne.s32.totalorder %s73, %s87
      %p89 = scmp.eq.s32.totalorder %s21, 0
      %p90 = por %p88, %p89
      %s91 = ssub.s32 %s15, %s22
      %p92 = scmp.eq.s32.totalorder %s91, 0
      %s94 = sadd.s32 %s93, 1
      %s95 = scalar_select %p92, %s93, %s94
      %p98 = pneg %p92
      %p99 = scmp.eq.s32.totalorder %s15, 1
      %p100 = por %p98, %p99
      %p101 = scmp.ne.s32.totalorder %s93, %s96
      %p102 = scmp.eq.s32.totalorder %s15, 0
      %p103 = por %p101, %p102
      %p104 = scmp.ne.s32.totalorder %s93, %s96
      %p105 = scmp.eq.s32.totalorder %s20, 1
      %p106 = por %p104, %p105
      %p107 = scmp.ne.s32.totalorder %s96, %s97
      %p108 = scmp.eq.s32.totalorder %s20, 0
      %p109 = por %p107, %p108
      %p110 = scmp.ne.s32.totalorder %s96, %s97
      %p111 = scmp.eq.s32.totalorder %s21, 1
      %p112 = por %p110, %p111
      %p114 = scmp.ne.s32.totalorder %s97, %s113
      %p115 = scmp.eq.s32.totalorder %s21, 0
      %p116 = por %p114, %p115
      %p117 = scmp.le.s32.totalorder 1, %s15
      %p118 = scmp.lt.s32.totalorder %s15, 3
      %p119 = pnand %p117, %p118
      %p120 = pneg %p119
      // Predicated region
      $region9: #{tpu_custom_call.1} parent=5 // pred_check
        _
      $region10: #{tpu_custom_call.1} parent=5 // pred_check_branch
        %122 = sbr.rel (%p119) target = $region12
      $region11: #{tpu_custom_call.1} parent=5 // pred_region
        %s123 = ssub.s32 %s15, 1
        // Predicated region
        $region13: #{tpu_custom_call.1} parent=11 // pred_check
          %p124 = pneg %p62
        $region14: #{tpu_custom_call.1} parent=11 // pred_check_branch
          %126 = sbr.rel (%p124) target = $region16
        $region15: #{tpu_custom_call.1} parent=11 // pred_region
          _
        $region16: #{tpu_custom_call.1} parent=11 // pred_fallthru
          _
        // Predicated region
        $region17: #{tpu_custom_call.1} parent=11 // pred_check
          %p127 = pneg %p83
        $region18: #{tpu_custom_call.1} parent=11 // pred_check_branch
          %129 = sbr.rel (%p127) target = $region20
        $region19: #{tpu_custom_call.1} parent=11 // pred_region
          _
        $region20: #{tpu_custom_call.1} parent=11 // pred_fallthru
          _
      $region12: #{tpu_custom_call.1} parent=5 // pred_fallthru
        _
      %p130 = scmp.lt.s32.totalorder %s15, 2
      // Predicated region
      $region21: #{tpu_custom_call.1} parent=5 // pred_check
        %p131 = pneg %p130
      $region22: #{tpu_custom_call.1} parent=5 // pred_check_branch
        %133 = sbr.rel (%p131) target = $region24
      $region23: #{tpu_custom_call.1} parent=5 // pred_region
        // Predicated region
        $region25: #{tpu_custom_call.1} parent=23 // pred_check
          %p134 = pneg %p35
        $region26: #{tpu_custom_call.1} parent=23 // pred_check_branch
          %136 = sbr.rel (%p134) target = $region28
        $region27: #{tpu_custom_call.1} parent=23 // pred_region
          %s137 = sand.u32 %s25, 1
          %s138 = scalar_lea.sflag [#allocation3], %s137
          %s139 = sand.u32 %s25, 1
          %s140 = smul.addr %s139, 16
          %s141 = scalar_lea.vmem [#allocation2], %s140
          %s143 = ssub.s32 256, 256
          %144 = vsyncadd %s138, %s143
          %s145 = smul.addr %s15, 2
          %s146 = smul.addr %s145, 128
          %s147 = scalar_lea.hbm %s0, %s146
          %s149 = sshll.u32 %s141, 4
          %s150 = int_to_ptr.vmem [resolvable:$true] %s149
          %152 = dma.hbm_to_vmem [thread:$0]  %s147, 256, %s150, %s138
        $region28: #{tpu_custom_call.1} parent=23 // pred_fallthru
          _
      $region24: #{tpu_custom_call.1} parent=5 // pred_fallthru
        _
      %p153 = scmp.le.s32.totalorder 1, %s15
      %p154 = scmp.lt.s32.totalorder %s15, 3
      %p155 = pnand %p153, %p154
      %p156 = pneg %p155
      // Predicated region
      $region29: #{tpu_custom_call.1} parent=5 // pred_check
        _
      $region30: #{tpu_custom_call.1} parent=5 // pred_check_branch
        %158 = sbr.rel (%p155) target = $region32
      $region31: #{tpu_custom_call.1} parent=5 // pred_region
        %s159 = ssub.s32 %s15, 1
        %s160 = sand.u32 %s28, 1
        %s161 = scalar_lea.sflag [#allocation3], %s160
        %s162 = sand.u32 %s28, 1
        %s163 = smul.addr %s162, 16
        %s164 = scalar_lea.vmem [#allocation2], %s163
        // Predicated region
        $region33: #{tpu_custom_call.1} parent=31 // pred_check
          %p165 = pneg %p41
        $region34: #{tpu_custom_call.1} parent=31 // pred_check_branch
          %167 = sbr.rel (%p165) target = $region36
        $region35: #{tpu_custom_call.1} parent=31 // pred_region
          %168 = dma.done %s161, 256
        $region36: #{tpu_custom_call.1} parent=31 // pred_fallthru
          _
        %s169 = sand.u32 %s28, 1
        %s170 = scalar_lea.sflag [#allocation3], %s169
        %s171 = sand.u32 %s28, 1
        %s172 = smul.addr %s171, 16
        %s173 = scalar_lea.vmem [#allocation2], %s172
        %p174 = pneg %p41
        %p175 = pneg %p38
        %p176 = pneg %p62
        %p177 = pneg %p59
        %p178 = pneg %p83
        %p179 = pneg %p80
        %p180 = pneg %p109
        %p181 = pneg %p106
        %s182 = sand.u32 %s96, 1
        %s183 = scalar_lea.sflag [#allocation4], %s182
        %s184 = sand.u32 %s96, 1
        %s185 = smul.addr %s184, 16
        %s186 = scalar_lea.vmem [#allocation5], %s185
        %v187 = vld [vmem:[%s164] sm:$0xff]
        %v188 = vld [vmem:[%s164 + $0x8] sm:$0xff]
        %v189 = vadd.f32 %v187, %v188
        %190 = vadd.xlane.f32.xlu0 %v189
        %v191 = vpop.xlane.xlu0 %190
        %v192 = vmul.f32 %v191, 0.00390625
        %v193 = vld [vmem:[%s1] sm:$0xff]
        %v195 = vlaneseq
        %v196 = vand.u32 %v195, 127
        %v197 = vlaneseq
        %v198 = vshrl.u32 %v197, 7
        %v199 = vsub.s32 %v196, %v198
        %v200 = vrot.slane %v192, %v199
        %vm201 = vcmask 64512
        %v202 = vsel %vm201, %v200, 0
        %204 = vmatprep.subr.mxu0 0.0
        %205 = vmatpush1.msra.mxu0 0.0
        %206 = vmatprep.subr.mxu0 0.0
        %207 = vmatpush1.msra.mxu0 0.0
        %208 = vmatprep.subr.mxu0 0.0
        %209 = vmatpush1.msra.mxu0 0.0
        %210 = vmatprep.subr.mxu0 0.0
        %211 = vmatpush1.msra.mxu0 0.0
        %212 = vmatprep.subr.mxu0 0.0
        %213 = vmatpush1.msra.mxu0 0.0
        %214 = vmatprep.subr.mxu0 0.0
        %215 = vmatpush1.msra.mxu0 0.0
        %216 = vmatprep.subr.mxu0 0.0
        %217 = vmatpush1.msra.mxu0 0.0
        %218 = vmatprep.subr.mxu0 0.0
        %219 = vmatpush1.msra.mxu0 0.0
        %220 = vmatprep.subr.mxu0 0.0
        %221 = vmatpush1.msra.mxu0 0.0
        %222 = vmatprep.subr.mxu0 0.0
        %223 = vmatpush1.msra.mxu0 0.0
        %224 = vmatprep.subr.mxu0 0.0
        %225 = vmatpush1.msra.mxu0 0.0
        %226 = vmatprep.subr.mxu0 0.0
        %227 = vmatpush1.msra.mxu0 0.0
        %228 = vmatprep.subr.mxu0 0.0
        %229 = vmatpush1.msra.mxu0 0.0
        %230 = vmatprep.subr.mxu0 0.0
        %231 = vmatpush1.msra.mxu0 0.0
        %232 = vmatprep.subr.mxu0 0.0
        %233 = vmatpush1.msra.mxu0 0.0
        %234 = vmatprep.subr.mxu0 0.0
        %235 = vmatpush1.msra.mxu0 %v193
        %236 = vmatprep.subr.mxu0 0.0
        %237 = vmatpush2.msra.mxu0 0.0
        %238 = vmatprep.subr.mxu0 0.0
        %239 = vmatpush2.msra.mxu0 0.0
        %240 = vmatprep.subr.mxu0 0.0
        %241 = vmatpush2.msra.mxu0 0.0
        %242 = vmatprep.subr.mxu0 0.0
        %243 = vmatpush2.msra.mxu0 0.0
        %244 = vmatprep.subr.mxu0 0.0
        %245 = vmatpush2.msra.mxu0 0.0
        %246 = vmatprep.subr.mxu0 0.0
        %247 = vmatpush2.msra.mxu0 0.0
        %248 = vmatprep.subr.mxu0 0.0
        %249 = vmatpush2.msra.mxu0 0.0
        %250 = vmatprep.subr.mxu0 0.0
        %251 = vmatpush2.msra.mxu0 0.0
        %252 = vmatprep.subr.mxu0 0.0
        %253 = vmatpush2.msra.mxu0 0.0
        %254 = vmatprep.subr.mxu0 0.0
        %255 = vmatpush2.msra.mxu0 0.0
        %256 = vmatprep.subr.mxu0 0.0
        %257 = vmatpush2.msra.mxu0 0.0
        %258 = vmatprep.subr.mxu0 0.0
        %259 = vmatpush2.msra.mxu0 0.0
        %260 = vmatprep.subr.mxu0 0.0
        %261 = vmatpush2.msra.mxu0 0.0
        %262 = vmatprep.subr.mxu0 0.0
        %263 = vmatpush2.msra.mxu0 0.0
        %264 = vmatprep.subr.mxu0 0.0
        %265 = vmatpush2.msra.mxu0 0.0
        %266 = vmatprep.subr.mxu0 0.0
        %267 = vmatpush2.msra.mxu0 0.0
        %268 = vmatprep.mubr.f32.mxu0 0.0
        %269 = vmatmul.mubr.f32.gmra.mxu0 %v202
        %v270 = vpop.f32.mrf.mxu0
        %v271 = vadd.f32 0.0, %v270
        %v272 = vpop.f32.mrf.mxu0
        %273 = vdwg.mxu0
        %v274 = vmax.f32 %v271, 0.0
        %v275 = vld [vmem:[%s2] sm:$0xf]
        %vm276 = vcmask 31744
        %v278 = vsel %vm276, %v274, 0
        %vm280 = vcmask 1043456
        %v282 = vsel %vm280, %v275, 0
        %284 = vmatprep.subr.mxu0 0.0
        %285 = vmatpush1.msra.mxu0 0.0
        %286 = vmatprep.subr.mxu0 0.0
        %287 = vmatpush1.msra.mxu0 0.0
        %288 = vmatprep.subr.mxu0 0.0
        %289 = vmatpush1.msra.mxu0 0.0
        %290 = vmatprep.subr.mxu0 0.0
        %291 = vmatpush1.msra.mxu0 0.0
        %292 = vmatprep.subr.mxu0 0.0
        %293 = vmatpush1.msra.mxu0 0.0
        %294 = vmatprep.subr.mxu0 0.0
        %295 = vmatpush1.msra.mxu0 0.0
        %296 = vmatprep.subr.mxu0 0.0
        %297 = vmatpush1.msra.mxu0 0.0
        %298 = vmatprep.subr.mxu0 0.0
        %299 = vmatpush1.msra.mxu0 0.0
        %300 = vmatprep.subr.mxu0 0.0
        %301 = vmatpush1.msra.mxu0 0.0
        %302 = vmatprep.subr.mxu0 0.0
        %303 = vmatpush1.msra.mxu0 0.0
        %304 = vmatprep.subr.mxu0 0.0
        %305 = vmatpush1.msra.mxu0 0.0
        %306 = vmatprep.subr.mxu0 0.0
        %307 = vmatpush1.msra.mxu0 0.0
        %308 = vmatprep.subr.mxu0 0.0
        %309 = vmatpush1.msra.mxu0 0.0
        %310 = vmatprep.subr.mxu0 0.0
        %311 = vmatpush1.msra.mxu0 0.0
        %312 = vmatprep.subr.mxu0 0.0
        %313 = vmatpush1.msra.mxu0 0.0
        %314 = vmatprep.subr.mxu0 0.0
        %315 = vmatpush1.msra.mxu0 %v282
        %316 = vmatprep.subr.mxu0 0.0
        %317 = vmatpush2.msra.mxu0 0.0
        %318 = vmatprep.subr.mxu0 0.0
        %319 = vmatpush2.msra.mxu0 0.0
        %320 = vmatprep.subr.mxu0 0.0
        %321 = vmatpush2.msra.mxu0 0.0
        %322 = vmatprep.subr.mxu0 0.0
        %323 = vmatpush2.msra.mxu0 0.0
        %324 = vmatprep.subr.mxu0 0.0
        %325 = vmatpush2.msra.mxu0 0.0
        %326 = vmatprep.subr.mxu0 0.0
        %327 = vmatpush2.msra.mxu0 0.0
        %328 = vmatprep.subr.mxu0 0.0
        %329 = vmatpush2.msra.mxu0 0.0
        %330 = vmatprep.subr.mxu0 0.0
        %331 = vmatpush2.msra.mxu0 0.0
        %332 = vmatprep.subr.mxu0 0.0
        %333 = vmatpush2.msra.mxu0 0.0
        %334 = vmatprep.subr.mxu0 0.0
        %335 = vmatpush2.msra.mxu0 0.0
        %336 = vmatprep.subr.mxu0 0.0
        %337 = vmatpush2.msra.mxu0 0.0
        %338 = vmatprep.subr.mxu0 0.0
        %339 = vmatpush2.msra.mxu0 0.0
        %340 = vmatprep.subr.mxu0 0.0
        %341 = vmatpush2.msra.mxu0 0.0
        %342 = vmatprep.subr.mxu0 0.0
        %343 = vmatpush2.msra.mxu0 0.0
        %344 = vmatprep.subr.mxu0 0.0
        %345 = vmatpush2.msra.mxu0 0.0
        %346 = vmatprep.subr.mxu0 0.0
        %347 = vmatpush2.msra.mxu0 0.0
        %348 = vmatprep.mubr.f32.mxu0 0.0
        %349 = vmatmul.mubr.f32.gmra.mxu0 %v278
        %v350 = vpop.f32.mrf.mxu0
        %v351 = vadd.f32 0.0, %v350
        %v352 = vpop.f32.mrf.mxu0
        %353 = vdwg.mxu0
        %v354 = vxor.u32 %v351, 2147483648
        %v355 = vmul.f32 %v354, 1.442695
        %v356 = vpow.pop %v355
        %v357 = vadd.f32 %v356, 1.0
        %v358 = vrcp.pop %v357
        %v359 = vmul.f32 1.0, %v358
        %v360 = vlaneseq
        %v361 = vshrl.u32 %v360, 7
        %v362 = vsub.s32 0, %v361
        %v363 = vrot.slane %v359, %v362
        %365 = vbcast.lane.b32.xlu0 %v363, 256
        %v366 = vpop.permute.xlu0 %365
        %v367 = vmul.f32 %v187, %v366
        %v368 = vmul.f32 %v188, %v366
        %369 = vst [vmem:[%s186] sm:$0xff] %v367
        %370 = vst [vmem:[%s186 + $0x8] sm:$0xff] %v368
        %s371 = sand.u32 %s96, 1
        %s372 = scalar_lea.sflag [#allocation4], %s371
        %s373 = sand.u32 %s96, 1
        %s374 = smul.addr %s373, 16
        %s375 = scalar_lea.vmem [#allocation5], %s374
        // Predicated region
        $region37: #{tpu_custom_call.1} parent=31 // pred_check
          %p376 = pneg %p106
        $region38: #{tpu_custom_call.1} parent=31 // pred_check_branch
          %378 = sbr.rel (%p376) target = $region40
        $region39: #{tpu_custom_call.1} parent=31 // pred_region
          %s380 = ssub.s32 256, 256
          %381 = vsyncadd %s372, %s380
          %s382 = smul.addr %s20, 2
          %s383 = smul.addr %s382, 128
          %s384 = scalar_lea.hbm %s3, %s383
          %s386 = sshll.u32 %s375, 4
          %s387 = int_to_ptr.vmem [resolvable:$true] %s386
          %389 = dma.vmem_to_hbm [thread:$0]  %s387, 256, %s384, %s372
        $region40: #{tpu_custom_call.1} parent=31 // pred_fallthru
          _
      $region32: #{tpu_custom_call.1} parent=5 // pred_fallthru
        _
      %p390 = scmp.le.s32.totalorder 2, %s15
      // Predicated region
      $region41: #{tpu_custom_call.1} parent=5 // pred_check
        %p391 = pneg %p390
      $region42: #{tpu_custom_call.1} parent=5 // pred_check_branch
        %393 = sbr.rel (%p391) target = $region44
      $region43: #{tpu_custom_call.1} parent=5 // pred_region
        %s394 = ssub.s32 %s15, 2
        // Predicated region
        $region45: #{tpu_custom_call.1} parent=43 // pred_check
          %p395 = pneg %p112
        $region46: #{tpu_custom_call.1} parent=43 // pred_check_branch
          %397 = sbr.rel (%p395) target = $region48
        $region47: #{tpu_custom_call.1} parent=43 // pred_region
          %s398 = sand.u32 %s97, 1
          %s399 = scalar_lea.sflag [#allocation4], %s398
          %s400 = sand.u32 %s97, 1
          %s401 = smul.addr %s400, 16
          %s402 = scalar_lea.vmem [#allocation5], %s401
          %403 = dma.done %s399, 256
        $region48: #{tpu_custom_call.1} parent=43 // pred_fallthru
          _
      $region44: #{tpu_custom_call.1} parent=5 // pred_fallthru
        _
    $region6: #{tpu_custom_call.1} parent=1 // loop_footer
      %s19 = sadd.s32 1, %s15
    $region7: #{tpu_custom_call.1} parent=1 // loop_footer_branch
      %14 = sbr.rel target = $region3
    $region8: #{tpu_custom_call.1} parent=1 // loop_exit
      _
    %404 = vsyncpa [#allocation3], 1
    %s405 = scalar_lea.sflag [#allocation3], 1
    %406 = vsyncpa %s405, 1
    %407 = vsyncpa [#allocation4], 1
    %s408 = scalar_lea.sflag [#allocation4], 1
    %409 = vsyncpa %s408, 1

</llo_original>
